<compile_context>
chip_gen: v5e
topology: v5e:2x2
jax: 0.10.0
libtpu: 0.0.40
codegen_flags: <defaults>
</compile_context>

<pallas_src>
import jax
import jax.numpy as jnp
from jax.experimental import pallas as pl
from jax.experimental.pallas import tpu as pltpu

# Problem sizes (small, consistent with the module's forward).
B = 2                  # batch per branch
C, H, W = 4, 16, 16
D_IN = C * H * W       # 1024 flattened features
D_HID = 128
D_OUT = 32             # embedding size


def _siamese_kernel(x1_ref, x2_ref, w1_ref, b1_ref, w2_ref, b2_ref,
                    o1_ref, o2_ref):
    """Single invocation, both siamese branches, shared VMEM-resident weights.

    x1/x2 : [B, D_IN]     f32
    w1    : [D_IN, D_HID] bf16
    b1    : [1, D_HID]    f32
    w2    : [D_HID, D_OUT] bf16
    b2    : [1, D_OUT]    f32
    o1/o2 : [B, D_OUT]    f32
    """
    w1 = w1_ref[...]
    b1 = b1_ref[...]
    w2 = w2_ref[...]
    b2 = b2_ref[...]

    def branch(x_f32):
        x = x_f32.astype(jnp.bfloat16)                      # hides under w1 DMA
        h = jnp.dot(x, w1, preferred_element_type=jnp.float32) + b1
        h = jnp.maximum(h, 0.0)                             # f32 ReLU (v5e-safe)
        return jnp.dot(h.astype(jnp.bfloat16), w2,
                       preferred_element_type=jnp.float32) + b2

    o1_ref[...] = branch(x1_ref[...])
    o2_ref[...] = branch(x2_ref[...])


# Cost hint: two matmuls per branch; bytes dominated by the bf16 w1 fetch.
_FLOPS = 2 * (2 * B) * D_IN * D_HID + 2 * (2 * B) * D_HID * D_OUT
_BYTES = (D_IN * D_HID * 2          # w1 bf16
          + D_HID * D_OUT * 2       # w2 bf16
          + 2 * B * D_IN * 4        # x1 + x2 f32
          + D_HID * 4 + D_OUT * 4   # biases
          + 2 * B * D_OUT * 4)      # outputs

_VMEM_SPEC = pl.BlockSpec(memory_space=pltpu.MemorySpace.VMEM)


@jax.jit
def siamese_forward(img1, img2, w1_b, b1, w2_b, b2):
    """Returns (feature1, feature2), both [B, D_OUT]. Weights shared & pre-prepared."""
    x1 = img1.reshape(B, D_IN)        # row-major flatten: layout plumbing only
    x2 = img2.reshape(B, D_IN)
    f1, f2 = pl.pallas_call(
        _siamese_kernel,
        out_shape=(jax.ShapeDtypeStruct((B, D_OUT), jnp.float32),
                   jax.ShapeDtypeStruct((B, D_OUT), jnp.float32)),
        in_specs=[_VMEM_SPEC] * 6,
        out_specs=(_VMEM_SPEC, _VMEM_SPEC),
        cost_estimate=pl.CostEstimate(
            flops=_FLOPS, transcendentals=0, bytes_accessed=_BYTES),
    )(x1, x2, w1_b, b1, w2_b, b2)
    return f1, f2


def _init_params(key):
    k1, k2 = jax.random.split(key)
    w1 = jax.random.normal(k1, (D_IN, D_HID), jnp.float32) * (1.0 / jnp.sqrt(D_IN))
    b1 = jnp.zeros((1, D_HID), jnp.float32)
    w2 = jax.random.normal(k2, (D_HID, D_OUT), jnp.float32) * (1.0 / jnp.sqrt(D_HID))
    b2 = jnp.zeros((1, D_OUT), jnp.float32)
    return w1, b1, w2, b2


def prepare_params(w1, b1, w2, b2):
    """One-time, out-of-forward-path weight prep (hoisted per perf review).

    bf16 weights halve the dominant w1 HBM fetch; biases stay f32.
    (Keep weights f32 here instead if bit-fidelity to the f32 module is needed.)
    """
    return w1.astype(jnp.bfloat16), b1, w2.astype(jnp.bfloat16), b2


if __name__ == "__main__":
    key = jax.random.PRNGKey(0)
    k_img1, k_img2, k_params = jax.random.split(key, 3)

    img1 = jax.random.normal(k_img1, (B, C, H, W), jnp.float32)
    img2 = jax.random.normal(k_img2, (B, C, H, W), jnp.float32)
    w1, b1, w2, b2 = _init_params(k_params)
    w1_b, b1_p, w2_b, b2_p = prepare_params(w1, b1, w2, b2)   # once, offline

    f1, f2 = siamese_forward(img1, img2, w1_b, b1_p, w2_b, b2_p)
    jax.block_until_ready((f1, f2))

    # Reference in plain JAX, mirroring the kernel's bf16-weight / f32-accum math.
    def ref_branch(img):
        x = img.reshape(B, D_IN).astype(jnp.bfloat16)
        h = jnp.dot(x, w1_b, preferred_element_type=jnp.float32) + b1_p
        h = jnp.maximum(h, 0.0)
        return jnp.dot(h.astype(jnp.bfloat16), w2_b,
                       preferred_element_type=jnp.float32) + b2_p

    r1, r2 = ref_branch(img1), ref_branch(img2)
    assert f1.shape == (B, D_OUT) and f2.shape == (B, D_OUT)
    assert jnp.allclose(f1, r1, atol=2e-2, rtol=2e-2)
    assert jnp.allclose(f2, r2, atol=2e-2, rtol=2e-2)

    print("KERNEL_OK")
</pallas_src>

<mosaic_0001>
module attributes {stable_mosaic.version = 11 : i64} {
  func.func @_siamese_kernel(%arg0: memref<2x1024xf32, #tpu.memory_space<vmem>>, %arg1: memref<2x1024xf32, #tpu.memory_space<vmem>>, %arg2: memref<1024x128xbf16, #tpu.memory_space<vmem>>, %arg3: memref<1x128xf32, #tpu.memory_space<vmem>>, %arg4: memref<128x32xbf16, #tpu.memory_space<vmem>>, %arg5: memref<1x32xf32, #tpu.memory_space<vmem>>, %arg6: memref<2x32xf32, #tpu.memory_space<vmem>>, %arg7: memref<2x32xf32, #tpu.memory_space<vmem>>) attributes {dimension_semantics = [], scalar_prefetch = 0 : i64, scratch_operands = 0 : i64, tpu.core_type = #tpu.core_type<tc>} {
    %c0 = arith.constant 0 : index
    %c0_0 = arith.constant 0 : index
    %0 = vector.load %arg2[%c0, %c0_0] : memref<1024x128xbf16, #tpu.memory_space<vmem>>, vector<1024x128xbf16>
    %c0_1 = arith.constant 0 : index
    %c0_2 = arith.constant 0 : index
    %1 = vector.load %arg3[%c0_1, %c0_2] : memref<1x128xf32, #tpu.memory_space<vmem>>, vector<1x128xf32>
    %c0_3 = arith.constant 0 : index
    %c0_4 = arith.constant 0 : index
    %2 = vector.load %arg4[%c0_3, %c0_4] : memref<128x32xbf16, #tpu.memory_space<vmem>>, vector<128x32xbf16>
    %c0_5 = arith.constant 0 : index
    %c0_6 = arith.constant 0 : index
    %3 = vector.load %arg5[%c0_5, %c0_6] : memref<1x32xf32, #tpu.memory_space<vmem>>, vector<1x32xf32>
    %c0_7 = arith.constant 0 : index
    %c0_8 = arith.constant 0 : index
    %4 = vector.load %arg0[%c0_7, %c0_8] : memref<2x1024xf32, #tpu.memory_space<vmem>>, vector<2x1024xf32>
    %5 = arith.truncf %4 : vector<2x1024xf32> to vector<2x1024xbf16>
    %cst = arith.constant dense<0.000000e+00> : vector<2x128xf32>
    %6 = tpu.matmul %5, %0, %cst {dimension_numbers = #tpu.dot_dimension_numbers<[1], [0], [0], [1], [0, 0, 1, 1], [], []>} : vector<2x1024xbf16>, vector<1024x128xbf16>, vector<2x128xf32> -> vector<2x128xf32>
    %7 = vector.broadcast %1 : vector<1x128xf32> to vector<2x128xf32>
    %8 = arith.addf %6, %7 : vector<2x128xf32>
    %cst_9 = arith.constant 0.000000e+00 : f32
    %9 = vector.broadcast %cst_9 : f32 to vector<2x128xf32>
    %10 = arith.maximumf %8, %9 : vector<2x128xf32>
    %11 = arith.truncf %10 : vector<2x128xf32> to vector<2x128xbf16>
    %cst_10 = arith.constant dense<0.000000e+00> : vector<2x32xf32>
    %12 = tpu.matmul %11, %2, %cst_10 {dimension_numbers = #tpu.dot_dimension_numbers<[1], [0], [0], [1], [0, 0, 1, 1], [], []>} : vector<2x128xbf16>, vector<128x32xbf16>, vector<2x32xf32> -> vector<2x32xf32>
    %13 = vector.broadcast %3 : vector<1x32xf32> to vector<2x32xf32>
    %14 = arith.addf %12, %13 : vector<2x32xf32>
    %c0_11 = arith.constant 0 : index
    %c0_12 = arith.constant 0 : index
    %15 = vector.load %arg6[%c0_11, %c0_12] : memref<2x32xf32, #tpu.memory_space<vmem>>, vector<2x32xf32>
    tpu.vector_store %arg6[%c0_11, %c0_12], %14 {strides = array<i32>} : memref<2x32xf32, #tpu.memory_space<vmem>>, vector<2x32xf32>,
    %c0_13 = arith.constant 0 : index
    %c0_14 = arith.constant 0 : index
    %16 = vector.load %arg1[%c0_13, %c0_14] : memref<2x1024xf32, #tpu.memory_space<vmem>>, vector<2x1024xf32>
    %17 = arith.truncf %16 : vector<2x1024xf32> to vector<2x1024xbf16>
    %cst_15 = arith.constant dense<0.000000e+00> : vector<2x128xf32>
    %18 = tpu.matmul %17, %0, %cst_15 {dimension_numbers = #tpu.dot_dimension_numbers<[1], [0], [0], [1], [0, 0, 1, 1], [], []>} : vector<2x1024xbf16>, vector<1024x128xbf16>, vector<2x128xf32> -> vector<2x128xf32>
    %19 = vector.broadcast %1 : vector<1x128xf32> to vector<2x128xf32>
    %20 = arith.addf %18, %19 : vector<2x128xf32>
    %cst_16 = arith.constant 0.000000e+00 : f32
    %21 = vector.broadcast %cst_16 : f32 to vector<2x128xf32>
    %22 = arith.maximumf %20, %21 : vector<2x128xf32>
    %23 = arith.truncf %22 : vector<2x128xf32> to vector<2x128xbf16>
    %cst_17 = arith.constant dense<0.000000e+00> : vector<2x32xf32>
    %24 = tpu.matmul %23, %2, %cst_17 {dimension_numbers = #tpu.dot_dimension_numbers<[1], [0], [0], [1], [0, 0, 1, 1], [], []>} : vector<2x128xbf16>, vector<128x32xbf16>, vector<2x32xf32> -> vector<2x32xf32>
    %25 = vector.broadcast %3 : vector<1x32xf32> to vector<2x32xf32>
    %26 = arith.addf %24, %25 : vector<2x32xf32>
    %c0_18 = arith.constant 0 : index
    %c0_19 = arith.constant 0 : index
    %27 = vector.load %arg7[%c0_18, %c0_19] : memref<2x32xf32, #tpu.memory_space<vmem>>, vector<2x32xf32>
    tpu.vector_store %arg7[%c0_18, %c0_19], %26 {strides = array<i32>} : memref<2x32xf32, #tpu.memory_space<vmem>>, vector<2x32xf32>,
    return
  }
}

</mosaic_0001>

<llo_original>
// kernel: siamese_forward.1
$region0: #{siamese_forward.1}
  #allocation0 [shape = 'u32[]', space=smem, size = 0x4, offset = 0x4, fixed_abs, tag = 'smem constant byte address 0x4 - core index']
  #allocation1 [shape = 'u32[72,128]{1,0:T(1,128)}', space=vmem, size = 0x9000, scoped, tag = 'internal scratch']
  %s0 = inlined_call_operand.vmem [shape: f32[2,1024], index: 0, kind: input, shape index: {}]
  %s1 = inlined_call_operand.vmem [shape: f32[2,1024], index: 1, kind: input, shape index: {}]
  %s2 = inlined_call_operand.hbm [shape: bf16[1024,128], index: 2, kind: input, shape index: {}]
  %s3 = inlined_call_operand.vmem [shape: f32[1,128], index: 3, kind: input, shape index: {}]
  %s4 = inlined_call_operand.vmem [shape: bf16[128,32], index: 4, kind: input, shape index: {}]
  %s5 = inlined_call_operand.vmem [shape: f32[1,32], index: 5, kind: input, shape index: {}]
  %s6 = inlined_call_operand.hbm [shape: f32[2,32], index: 6, kind: output, shape index: {0}]
  %s7 = inlined_call_operand.hbm [shape: f32[2,32], index: 7, kind: output, shape index: {1}]
  %8 = xla_tuple %s6, %s7
  %s9 = sld [smem:[#allocation0]]
  $region46: #{siamese_forward.1} parent=0
    _
  %s11 = ssub.s32 1, %s9
  %s12 = scalar_select 0, %s11, %s9
  $region1: #{siamese_forward.1} parent=0
    #allocation2 [shape = 'u8[262144]{0}', space=vmem, size = 0x40000, scoped, tag = 'input window, operand 2, single buffered']
    #allocation3 [shape = 's32[1]{0}', space=sflag, size = 0x4, scoped, tag = 'scoped memory for siamese_forward.1']
    #allocation4 [shape = 's32[1]{0}', space=sflag, size = 0x4, scoped, tag = 'scoped memory for siamese_forward.1']
    #allocation5 [shape = 'u8[1024]{0}', space=vmem, size = 0x400, scoped, tag = 'output window, operand 0, single buffered']
    #allocation6 [shape = 'u8[1024]{0}', space=vmem, size = 0x400, scoped, tag = 'output window, operand 1, single buffered']
    #allocation7 [shape = 's32[1]{0}', space=sflag, size = 0x4, scoped, tag = 'scoped memory for siamese_forward.1']
    %13 = vsyncpa [#allocation3], 0
    %14 = vsyncpa [#allocation4], 0
    %15 = vsyncpa [#allocation7], 0
    // Predicated region
    $region2: #{siamese_forward.1} parent=1 // pred_check
      _
    $region3: #{siamese_forward.1} parent=1 // pred_check_branch
      %17 = sbr.rel (0) target = $region5
    $region4: #{siamese_forward.1} parent=1 // pred_region
      _
    $region5: #{siamese_forward.1} parent=1 // pred_fallthru
      _
    // Predicated region
    $region6: #{siamese_forward.1} parent=1 // pred_check
      _
    $region7: #{siamese_forward.1} parent=1 // pred_check_branch
      %19 = sbr.rel (0) target = $region9
    $region8: #{siamese_forward.1} parent=1 // pred_region
      _
    $region9: #{siamese_forward.1} parent=1 // pred_fallthru
      _
    // Predicated region
    $region10: #{siamese_forward.1} parent=1 // pred_check
      _
    $region11: #{siamese_forward.1} parent=1 // pred_check_branch
      %21 = sbr.rel (0) target = $region13
    $region12: #{siamese_forward.1} parent=1 // pred_region
      %23 = vsyncadd [#allocation3], 0
      %s24 = sshll.u32 %s2, 4
      %s25 = int_to_ptr.hbm [resolvable:$true] %s24
      %s26 = sshll.u32 [#allocation2], 4
      %s27 = int_to_ptr.vmem [resolvable:$true] %s26
      %32 = dma.hbm_to_vmem [thread:$0]  %s25, 8192, %s27, [#allocation3], 64, 64, 4
    $region13: #{siamese_forward.1} parent=1 // pred_fallthru
      _
    // Predicated region
    $region14: #{siamese_forward.1} parent=1 // pred_check
      _
    $region15: #{siamese_forward.1} parent=1 // pred_check_branch
      %34 = sbr.rel (0) target = $region17
    $region16: #{siamese_forward.1} parent=1 // pred_region
      _
    $region17: #{siamese_forward.1} parent=1 // pred_fallthru
      _
    // Predicated region
    $region18: #{siamese_forward.1} parent=1 // pred_check
      _
    $region19: #{siamese_forward.1} parent=1 // pred_check_branch
      %36 = sbr.rel (0) target = $region21
    $region20: #{siamese_forward.1} parent=1 // pred_region
      _
    $region21: #{siamese_forward.1} parent=1 // pred_fallthru
      _
    // Predicated region
    $region22: #{siamese_forward.1} parent=1 // pred_check
      _
    $region23: #{siamese_forward.1} parent=1 // pred_check_branch
      %38 = sbr.rel (0) target = $region25
    $region24: #{siamese_forward.1} parent=1 // pred_region
      _
    $region25: #{siamese_forward.1} parent=1 // pred_fallthru
      _
    // Predicated region
    $region26: #{siamese_forward.1} parent=1 // pred_check
      _
    $region27: #{siamese_forward.1} parent=1 // pred_check_branch
      %40 = sbr.rel (0) target = $region29
    $region28: #{siamese_forward.1} parent=1 // pred_region
      %42 = dma.done [#allocation3], 8192
    $region29: #{siamese_forward.1} parent=1 // pred_fallthru
      _
    %v43 = vld [vmem:[#allocation2] sm:$0xf]
    %v44 = vld [vmem:[#allocation2 + $0x4] sm:$0xf]
    %v45 = vld [vmem:[#allocation2 + $0x8] sm:$0xf]
    %v46 = vld [vmem:[#allocation2 + $0xc] sm:$0xf]
    %v47 = vld [vmem:[#allocation2 + $0x10] sm:$0xf]
    %v48 = vld [vmem:[#allocation2 + $0x14] sm:$0xf]
    %v49 = vld [vmem:[#allocation2 + $0x18] sm:$0xf]
    %v50 = vld [vmem:[#allocation2 + $0x1c] sm:$0xf]
    %v51 = vld [vmem:[#allocation2 + $0x20] sm:$0xf]
    %v52 = vld [vmem:[#allocation2 + $0x24] sm:$0xf]
    %v53 = vld [vmem:[#allocation2 + $0x28] sm:$0xf]
    %v54 = vld [vmem:[#allocation2 + $0x2c] sm:$0xf]
    %v55 = vld [vmem:[#allocation2 + $0x30] sm:$0xf]
    %v56 = vld [vmem:[#allocation2 + $0x34] sm:$0xf]
    %v57 = vld [vmem:[#allocation2 + $0x38] sm:$0xf]
    %v58 = vld [vmem:[#allocation2 + $0x3c] sm:$0xf]
    %v59 = vld [vmem:[#allocation2 + $0x40] sm:$0xf]
    %v60 = vld [vmem:[#allocation2 + $0x44] sm:$0xf]
    %v61 = vld [vmem:[#allocation2 + $0x48] sm:$0xf]
    %v62 = vld [vmem:[#allocation2 + $0x4c] sm:$0xf]
    %v63 = vld [vmem:[#allocation2 + $0x50] sm:$0xf]
    %v64 = vld [vmem:[#allocation2 + $0x54] sm:$0xf]
    %v65 = vld [vmem:[#allocation2 + $0x58] sm:$0xf]
    %v66 = vld [vmem:[#allocation2 + $0x5c] sm:$0xf]
    %v67 = vld [vmem:[#allocation2 + $0x60] sm:$0xf]
    %v68 = vld [vmem:[#allocation2 + $0x64] sm:$0xf]
    %v69 = vld [vmem:[#allocation2 + $0x68] sm:$0xf]
    %v70 = vld [vmem:[#allocation2 + $0x6c] sm:$0xf]
    %v71 = vld [vmem:[#allocation2 + $0x70] sm:$0xf]
    %v72 = vld [vmem:[#allocation2 + $0x74] sm:$0xf]
    %v73 = vld [vmem:[#allocation2 + $0x78] sm:$0xf]
    %v74 = vld [vmem:[#allocation2 + $0x7c] sm:$0xf]
    %v75 = vld [vmem:[#allocation2 + $0x80] sm:$0xf]
    %v76 = vld [vmem:[#allocation2 + $0x84] sm:$0xf]
    %v77 = vld [vmem:[#allocation2 + $0x88] sm:$0xf]
    %v78 = vld [vmem:[#allocation2 + $0x8c] sm:$0xf]
    %v79 = vld [vmem:[#allocation2 + $0x90] sm:$0xf]
    %v80 = vld [vmem:[#allocation2 + $0x94] sm:$0xf]
    %v81 = vld [vmem:[#allocation2 + $0x98] sm:$0xf]
    %v82 = vld [vmem:[#allocation2 + $0x9c] sm:$0xf]
    %v83 = vld [vmem:[#allocation2 + $0xa0] sm:$0xf]
    %v84 = vld [vmem:[#allocation2 + $0xa4] sm:$0xf]
    %v85 = vld [vmem:[#allocation2 + $0xa8] sm:$0xf]
    %v86 = vld [vmem:[#allocation2 + $0xac] sm:$0xf]
    %v87 = vld [vmem:[#allocation2 + $0xb0] sm:$0xf]
    %v88 = vld [vmem:[#allocation2 + $0xb4] sm:$0xf]
    %v89 = vld [vmem:[#allocation2 + $0xb8] sm:$0xf]
    %v90 = vld [vmem:[#allocation2 + $0xbc] sm:$0xf]
    %v91 = vld [vmem:[#allocation2 + $0xc0] sm:$0xf]
    %v92 = vld [vmem:[#allocation2 + $0xc4] sm:$0xf]
    %v93 = vld [vmem:[#allocation2 + $0xc8] sm:$0xf]
    %v94 = vld [vmem:[#allocation2 + $0xcc] sm:$0xf]
    %v95 = vld [vmem:[#allocation2 + $0xd0] sm:$0xf]
    %v96 = vld [vmem:[#allocation2 + $0xd4] sm:$0xf]
    %v97 = vld [vmem:[#allocation2 + $0xd8] sm:$0xf]
    %v98 = vld [vmem:[#allocation2 + $0xdc] sm:$0xf]
    %v99 = vld [vmem:[#allocation2 + $0xe0] sm:$0xf]
    %v100 = vld [vmem:[#allocation2 + $0xe4] sm:$0xf]
    %v101 = vld [vmem:[#allocation2 + $0xe8] sm:$0xf]
    %v102 = vld [vmem:[#allocation2 + $0xec] sm:$0xf]
    %v103 = vld [vmem:[#allocation2 + $0xf0] sm:$0xf]
    %v104 = vld [vmem:[#allocation2 + $0xf4] sm:$0xf]
    %v105 = vld [vmem:[#allocation2 + $0xf8] sm:$0xf]
    %v106 = vld [vmem:[#allocation2 + $0xfc] sm:$0xf]
    %v107 = vld [vmem:[#allocation2 + $0x100] sm:$0xf]
    %v108 = vld [vmem:[#allocation2 + $0x104] sm:$0xf]
    %v109 = vld [vmem:[#allocation2 + $0x108] sm:$0xf]
    %v110 = vld [vmem:[#allocation2 + $0x10c] sm:$0xf]
    %v111 = vld [vmem:[#allocation2 + $0x110] sm:$0xf]
    %v112 = vld [vmem:[#allocation2 + $0x114] sm:$0xf]
    %v113 = vld [vmem:[#allocation2 + $0x118] sm:$0xf]
    %v114 = vld [vmem:[#allocation2 + $0x11c] sm:$0xf]
    %v115 = vld [vmem:[#allocation2 + $0x120] sm:$0xf]
    %v116 = vld [vmem:[#allocation2 + $0x124] sm:$0xf]
    %v117 = vld [vmem:[#allocation2 + $0x128] sm:$0xf]
    %v118 = vld [vmem:[#allocation2 + $0x12c] sm:$0xf]
    %v119 = vld [vmem:[#allocation2 + $0x130] sm:$0xf]
    %v120 = vld [vmem:[#allocation2 + $0x134] sm:$0xf]
    %v121 = vld [vmem:[#allocation2 + $0x138] sm:$0xf]
    %v122 = vld [vmem:[#allocation2 + $0x13c] sm:$0xf]
    %v123 = vld [vmem:[#allocation2 + $0x140] sm:$0xf]
    %v124 = vld [vmem:[#allocation2 + $0x144] sm:$0xf]
    %v125 = vld [vmem:[#allocation2 + $0x148] sm:$0xf]
    %v126 = vld [vmem:[#allocation2 + $0x14c] sm:$0xf]
    %v127 = vld [vmem:[#allocation2 + $0x150] sm:$0xf]
    %v128 = vld [vmem:[#allocation2 + $0x154] sm:$0xf]
    %v129 = vld [vmem:[#allocation2 + $0x158] sm:$0xf]
    %v130 = vld [vmem:[#allocation2 + $0x15c] sm:$0xf]
    %v131 = vld [vmem:[#allocation2 + $0x160] sm:$0xf]
    %v132 = vld [vmem:[#allocation2 + $0x164] sm:$0xf]
    %v133 = vld [vmem:[#allocation2 + $0x168] sm:$0xf]
    %v134 = vld [vmem:[#allocation2 + $0x16c] sm:$0xf]
    %v135 = vld [vmem:[#allocation2 + $0x170] sm:$0xf]
    %v136 = vld [vmem:[#allocation2 + $0x174] sm:$0xf]
    %v137 = vld [vmem:[#allocation2 + $0x178] sm:$0xf]
    %v138 = vld [vmem:[#allocation2 + $0x17c] sm:$0xf]
    %v139 = vld [vmem:[#allocation2 + $0x180] sm:$0xf]
    %v140 = vld [vmem:[#allocation2 + $0x184] sm:$0xf]
    %v141 = vld [vmem:[#allocation2 + $0x188] sm:$0xf]
    %v142 = vld [vmem:[#allocation2 + $0x18c] sm:$0xf]
    %v143 = vld [vmem:[#allocation2 + $0x190] sm:$0xf]
    %v144 = vld [vmem:[#allocation2 + $0x194] sm:$0xf]
    %v145 = vld [vmem:[#allocation2 + $0x198] sm:$0xf]
    %v146 = vld [vmem:[#allocation2 + $0x19c] sm:$0xf]
    %v147 = vld [vmem:[#allocation2 + $0x1a0] sm:$0xf]
    %v148 = vld [vmem:[#allocation2 + $0x1a4] sm:$0xf]
    %v149 = vld [vmem:[#allocation2 + $0x1a8] sm:$0xf]
    %v150 = vld [vmem:[#allocation2 + $0x1ac] sm:$0xf]
    %v151 = vld [vmem:[#allocation2 + $0x1b0] sm:$0xf]
    %v152 = vld [vmem:[#allocation2 + $0x1b4] sm:$0xf]
    %v153 = vld [vmem:[#allocation2 + $0x1b8] sm:$0xf]
    %v154 = vld [vmem:[#allocation2 + $0x1bc] sm:$0xf]
    %v155 = vld [vmem:[#allocation2 + $0x1c0] sm:$0xf]
    %v156 = vld [vmem:[#allocation2 + $0x1c4] sm:$0xf]
    %v157 = vld [vmem:[#allocation2 + $0x1c8] sm:$0xf]
    %v158 = vld [vmem:[#allocation2 + $0x1cc] sm:$0xf]
    %v159 = vld [vmem:[#allocation2 + $0x1d0] sm:$0xf]
    %v160 = vld [vmem:[#allocation2 + $0x1d4] sm:$0xf]
    %v161 = vld [vmem:[#allocation2 + $0x1d8] sm:$0xf]
    %v162 = vld [vmem:[#allocation2 + $0x1dc] sm:$0xf]
    %v163 = vld [vmem:[#allocation2 + $0x1e0] sm:$0xf]
    %v164 = vld [vmem:[#allocation2 + $0x1e4] sm:$0xf]
    %v165 = vld [vmem:[#allocation2 + $0x1e8] sm:$0xf]
    %v166 = vld [vmem:[#allocation2 + $0x1ec] sm:$0xf]
    %v167 = vld [vmem:[#allocation2 + $0x1f0] sm:$0xf]
    %v168 = vld [vmem:[#allocation2 + $0x1f4] sm:$0xf]
    %v169 = vld [vmem:[#allocation2 + $0x1f8] sm:$0xf]
    %v170 = vld [vmem:[#allocation2 + $0x1fc] sm:$0xf]
    %v171 = vld [vmem:[%s3] sm:$0x1]
    %v172 = vld [vmem:[%s4] sm:$0xf]
    %v173 = vld [vmem:[%s4 + $0x4] sm:$0xf]
    %v174 = vld [vmem:[%s4 + $0x8] sm:$0xf]
    %v175 = vld [vmem:[%s4 + $0xc] sm:$0xf]
    %v176 = vld [vmem:[%s4 + $0x10] sm:$0xf]
    %v177 = vld [vmem:[%s4 + $0x14] sm:$0xf]
    %v178 = vld [vmem:[%s4 + $0x18] sm:$0xf]
    %v179 = vld [vmem:[%s4 + $0x1c] sm:$0xf]
    %v180 = vld [vmem:[%s4 + $0x20] sm:$0xf]
    %v181 = vld [vmem:[%s4 + $0x24] sm:$0xf]
    %v182 = vld [vmem:[%s4 + $0x28] sm:$0xf]
    %v183 = vld [vmem:[%s4 + $0x2c] sm:$0xf]
    %v184 = vld [vmem:[%s4 + $0x30] sm:$0xf]
    %v185 = vld [vmem:[%s4 + $0x34] sm:$0xf]
    %v186 = vld [vmem:[%s4 + $0x38] sm:$0xf]
    %v187 = vld [vmem:[%s4 + $0x3c] sm:$0xf]
    %v188 = vld [vmem:[%s5] sm:$0x1]
    %v189 = vld [vmem:[%s0] sm:$0xff]
    %v190 = vld [vmem:[%s0 + $0x8] sm:$0xff]
    %193 = vst [vmem:[#allocation1] ss:$4 sm:$0xff] %v189
    %s194 = scalar_lea.vmem [#allocation1], 32
    %195 = vst [vmem:[%s194] ss:$4 sm:$0xff] %v190
    %v196 = vld.sshfl [vmem:[#allocation1] sm:$0xff pattern:$0x73625140]
    %v197 = vld.sshfl [vmem:[#allocation1 + $0x8] sm:$0xff pattern:$0x73625140]
    %v198 = vld.sshfl [vmem:[#allocation1 + $0x10] sm:$0xff pattern:$0x73625140]
    %v199 = vld.sshfl [vmem:[#allocation1 + $0x18] sm:$0xff pattern:$0x73625140]
    %v200 = vld.sshfl [vmem:[#allocation1 + $0x20] sm:$0xff pattern:$0x73625140]
    %v201 = vld.sshfl [vmem:[#allocation1 + $0x28] sm:$0xff pattern:$0x73625140]
    %v202 = vld.sshfl [vmem:[#allocation1 + $0x30] sm:$0xff pattern:$0x73625140]
    %v203 = vld.sshfl [vmem:[#allocation1 + $0x38] sm:$0xff pattern:$0x73625140]
    %v212 = vpack.c.bf16 %v196, %v196
    %v213 = vpack.c.bf16 %v197, %v197
    %v214 = vpack.c.bf16 %v198, %v198
    %v215 = vpack.c.bf16 %v199, %v199
    %v216 = vpack.c.bf16 %v200, %v200
    %v217 = vpack.c.bf16 %v201, %v201
    %v218 = vpack.c.bf16 %v202, %v202
    %v219 = vpack.c.bf16 %v203, %v203
    %v221 = vperm.slane %v171, 0
    %v351 = vunpack.c.l.b16 %v43
    %v352 = vunpack.c.l.b16 %v44
    %v353 = vunpack.c.l.b16 %v45
    %v354 = vunpack.c.l.b16 %v46
    %v355 = vunpack.c.l.b16 %v47
    %v356 = vunpack.c.l.b16 %v48
    %v357 = vunpack.c.l.b16 %v49
    %v358 = vunpack.c.l.b16 %v50
    %v359 = vunpack.c.l.b16 %v51
    %v360 = vunpack.c.l.b16 %v52
    %v361 = vunpack.c.l.b16 %v53
    %v362 = vunpack.c.l.b16 %v54
    %v363 = vunpack.c.l.b16 %v55
    %v364 = vunpack.c.l.b16 %v56
    %v365 = vunpack.c.l.b16 %v57
    %v366 = vunpack.c.l.b16 %v58
    %v367 = vunpack.c.l.b16 %v59
    %v368 = vunpack.c.l.b16 %v60
    %v369 = vunpack.c.l.b16 %v61
    %v370 = vunpack.c.l.b16 %v62
    %v371 = vunpack.c.l.b16 %v63
    %v372 = vunpack.c.l.b16 %v64
    %v373 = vunpack.c.l.b16 %v65
    %v374 = vunpack.c.l.b16 %v66
    %v375 = vunpack.c.l.b16 %v67
    %v376 = vunpack.c.l.b16 %v68
    %v377 = vunpack.c.l.b16 %v69
    %v378 = vunpack.c.l.b16 %v70
    %v379 = vunpack.c.l.b16 %v71
    %v380 = vunpack.c.l.b16 %v72
    %v381 = vunpack.c.l.b16 %v73
    %v382 = vunpack.c.l.b16 %v74
    %v383 = vunpack.c.l.b16 %v75
    %v384 = vunpack.c.l.b16 %v76
    %v385 = vunpack.c.l.b16 %v77
    %v386 = vunpack.c.l.b16 %v78
    %v387 = vunpack.c.l.b16 %v79
    %v388 = vunpack.c.l.b16 %v80
    %v389 = vunpack.c.l.b16 %v81
    %v390 = vunpack.c.l.b16 %v82
    %v391 = vunpack.c.l.b16 %v83
    %v392 = vunpack.c.l.b16 %v84
    %v393 = vunpack.c.l.b16 %v85
    %v394 = vunpack.c.l.b16 %v86
    %v395 = vunpack.c.l.b16 %v87
    %v396 = vunpack.c.l.b16 %v88
    %v397 = vunpack.c.l.b16 %v89
    %v398 = vunpack.c.l.b16 %v90
    %v399 = vunpack.c.l.b16 %v91
    %v400 = vunpack.c.l.b16 %v92
    %v401 = vunpack.c.l.b16 %v93
    %v402 = vunpack.c.l.b16 %v94
    %v403 = vunpack.c.l.b16 %v95
    %v404 = vunpack.c.l.b16 %v96
    %v405 = vunpack.c.l.b16 %v97
    %v406 = vunpack.c.l.b16 %v98
    %v407 = vunpack.c.l.b16 %v99
    %v408 = vunpack.c.l.b16 %v100
    %v409 = vunpack.c.l.b16 %v101
    %v410 = vunpack.c.l.b16 %v102
    %v411 = vunpack.c.l.b16 %v103
    %v412 = vunpack.c.l.b16 %v104
    %v413 = vunpack.c.l.b16 %v105
    %v414 = vunpack.c.l.b16 %v106
    %v415 = vunpack.c.l.b16 %v107
    %v416 = vunpack.c.l.b16 %v108
    %v417 = vunpack.c.l.b16 %v109
    %v418 = vunpack.c.l.b16 %v110
    %v419 = vunpack.c.l.b16 %v111
    %v420 = vunpack.c.l.b16 %v112
    %v421 = vunpack.c.l.b16 %v113
    %v422 = vunpack.c.l.b16 %v114
    %v423 = vunpack.c.l.b16 %v115
    %v424 = vunpack.c.l.b16 %v116
    %v425 = vunpack.c.l.b16 %v117
    %v426 = vunpack.c.l.b16 %v118
    %v427 = vunpack.c.l.b16 %v119
    %v428 = vunpack.c.l.b16 %v120
    %v429 = vunpack.c.l.b16 %v121
    %v430 = vunpack.c.l.b16 %v122
    %v431 = vunpack.c.l.b16 %v123
    %v432 = vunpack.c.l.b16 %v124
    %v433 = vunpack.c.l.b16 %v125
    %v434 = vunpack.c.l.b16 %v126
    %v435 = vunpack.c.l.b16 %v127
    %v436 = vunpack.c.l.b16 %v128
    %v437 = vunpack.c.l.b16 %v129
    %v438 = vunpack.c.l.b16 %v130
    %v439 = vunpack.c.l.b16 %v131
    %v440 = vunpack.c.l.b16 %v132
    %v441 = vunpack.c.l.b16 %v133
    %v442 = vunpack.c.l.b16 %v134
    %v443 = vunpack.c.l.b16 %v135
    %v444 = vunpack.c.l.b16 %v136
    %v445 = vunpack.c.l.b16 %v137
    %v446 = vunpack.c.l.b16 %v138
    %v447 = vunpack.c.l.b16 %v139
    %v448 = vunpack.c.l.b16 %v140
    %v449 = vunpack.c.l.b16 %v141
    %v450 = vunpack.c.l.b16 %v142
    %v451 = vunpack.c.l.b16 %v143
    %v452 = vunpack.c.l.b16 %v144
    %v453 = vunpack.c.l.b16 %v145
    %v454 = vunpack.c.l.b16 %v146
    %v455 = vunpack.c.l.b16 %v147
    %v456 = vunpack.c.l.b16 %v148
    %v457 = vunpack.c.l.b16 %v149
    %v458 = vunpack.c.l.b16 %v150
    %v459 = vunpack.c.l.b16 %v151
    %v460 = vunpack.c.l.b16 %v152
    %v461 = vunpack.c.l.b16 %v153
    %v462 = vunpack.c.l.b16 %v154
    %v463 = vunpack.c.l.b16 %v155
    %v464 = vunpack.c.l.b16 %v156
    %v465 = vunpack.c.l.b16 %v157
    %v466 = vunpack.c.l.b16 %v158
    %v467 = vunpack.c.l.b16 %v159
    %v468 = vunpack.c.l.b16 %v160
    %v469 = vunpack.c.l.b16 %v161
    %v470 = vunpack.c.l.b16 %v162
    %v471 = vunpack.c.l.b16 %v163
    %v472 = vunpack.c.l.b16 %v164
    %v473 = vunpack.c.l.b16 %v165
    %v474 = vunpack.c.l.b16 %v166
    %v475 = vunpack.c.l.b16 %v167
    %v476 = vunpack.c.l.b16 %v168
    %v477 = vunpack.c.l.b16 %v169
    %v478 = vunpack.c.l.b16 %v170
    %v479 = vpack.c.b16 %v352, %v351
    %v480 = vpack.c.b16 %v354, %v353
    %v481 = vpack.c.b16 %v356, %v355
    %v482 = vpack.c.b16 %v358, %v357
    %v483 = vpack.c.b16 %v360, %v359
    %v484 = vpack.c.b16 %v362, %v361
    %v485 = vpack.c.b16 %v364, %v363
    %v486 = vpack.c.b16 %v366, %v365
    %v487 = vpack.c.b16 %v368, %v367
    %v488 = vpack.c.b16 %v370, %v369
    %v489 = vpack.c.b16 %v372, %v371
    %v490 = vpack.c.b16 %v374, %v373
    %v491 = vpack.c.b16 %v376, %v375
    %v492 = vpack.c.b16 %v378, %v377
    %v493 = vpack.c.b16 %v380, %v379
    %v494 = vpack.c.b16 %v382, %v381
    %v495 = vpack.c.b16 %v384, %v383
    %v496 = vpack.c.b16 %v386, %v385
    %v497 = vpack.c.b16 %v388, %v387
    %v498 = vpack.c.b16 %v390, %v389
    %v499 = vpack.c.b16 %v392, %v391
    %v500 = vpack.c.b16 %v394, %v393
    %v501 = vpack.c.b16 %v396, %v395
    %v502 = vpack.c.b16 %v398, %v397
    %v503 = vpack.c.b16 %v400, %v399
    %v504 = vpack.c.b16 %v402, %v401
    %v505 = vpack.c.b16 %v404, %v403
    %v506 = vpack.c.b16 %v406, %v405
    %v507 = vpack.c.b16 %v408, %v407
    %v508 = vpack.c.b16 %v410, %v409
    %v509 = vpack.c.b16 %v412, %v411
    %v510 = vpack.c.b16 %v414, %v413
    %v511 = vpack.c.b16 %v416, %v415
    %v512 = vpack.c.b16 %v418, %v417
    %v513 = vpack.c.b16 %v420, %v419
    %v514 = vpack.c.b16 %v422, %v421
    %v515 = vpack.c.b16 %v424, %v423
    %v516 = vpack.c.b16 %v426, %v425
    %v517 = vpack.c.b16 %v428, %v427
    %v518 = vpack.c.b16 %v430, %v429
    %v519 = vpack.c.b16 %v432, %v431
    %v520 = vpack.c.b16 %v434, %v433
    %v521 = vpack.c.b16 %v436, %v435
    %v522 = vpack.c.b16 %v438, %v437
    %v523 = vpack.c.b16 %v440, %v439
    %v524 = vpack.c.b16 %v442, %v441
    %v525 = vpack.c.b16 %v444, %v443
    %v526 = vpack.c.b16 %v446, %v445
    %v527 = vpack.c.b16 %v448, %v447
    %v528 = vpack.c.b16 %v450, %v449
    %v529 = vpack.c.b16 %v452, %v451
    %v530 = vpack.c.b16 %v454, %v453
    %v531 = vpack.c.b16 %v456, %v455
    %v532 = vpack.c.b16 %v458, %v457
    %v533 = vpack.c.b16 %v460, %v459
    %v534 = vpack.c.b16 %v462, %v461
    %v535 = vpack.c.b16 %v464, %v463
    %v536 = vpack.c.b16 %v466, %v465
    %v537 = vpack.c.b16 %v468, %v467
    %v538 = vpack.c.b16 %v470, %v469
    %v539 = vpack.c.b16 %v472, %v471
    %v540 = vpack.c.b16 %v474, %v473
    %v541 = vpack.c.b16 %v476, %v475
    %v542 = vpack.c.b16 %v478, %v477
    %607 = vmatpush.bf16.msra.mxu0 %v486
    %608 = vmatpush.bf16.msra.mxu0 %v485
    %609 = vmatpush.bf16.msra.mxu0 %v484
    %610 = vmatpush.bf16.msra.mxu0 %v483
    %611 = vmatpush.bf16.msra.mxu0 %v482
    %612 = vmatpush.bf16.msra.mxu0 %v481
    %613 = vmatpush.bf16.msra.mxu0 %v480
    %614 = vmatpush.bf16.msra.mxu0 %v479
    %615 = vmatmul.bf16.gmra.mxu0 %v212
    %v616 = vpop.f32.mrf.mxu0
    %v617 = vadd.f32 %v221, %v616
    %v618 = vpop.f32.mrf.mxu0
    %619 = vdwg.mxu0
    %620 = vmatpush.bf16.msra.mxu0 %v494
    %621 = vmatpush.bf16.msra.mxu0 %v493
    %622 = vmatpush.bf16.msra.mxu0 %v492
    %623 = vmatpush.bf16.msra.mxu0 %v491
    %624 = vmatpush.bf16.msra.mxu0 %v490
    %625 = vmatpush.bf16.msra.mxu0 %v489
    %626 = vmatpush.bf16.msra.mxu0 %v488
    %627 = vmatpush.bf16.msra.mxu0 %v487
    %628 = vmatmul.bf16.gmra.mxu0 %v213
    %v629 = vpop.f32.mrf.mxu0
    %v630 = vadd.f32 %v617, %v629
    %v631 = vpop.f32.mrf.mxu0
    %632 = vdwg.mxu0
    %633 = vmatpush.bf16.msra.mxu0 %v502
    %634 = vmatpush.bf16.msra.mxu0 %v501
    %635 = vmatpush.bf16.msra.mxu0 %v500
    %636 = vmatpush.bf16.msra.mxu0 %v499
    %637 = vmatpush.bf16.msra.mxu0 %v498
    %638 = vmatpush.bf16.msra.mxu0 %v497
    %639 = vmatpush.bf16.msra.mxu0 %v496
    %640 = vmatpush.bf16.msra.mxu0 %v495
    %641 = vmatmul.bf16.gmra.mxu0 %v214
    %v642 = vpop.f32.mrf.mxu0
    %v643 = vadd.f32 %v630, %v642
    %v644 = vpop.f32.mrf.mxu0
    %645 = vdwg.mxu0
    %646 = vmatpush.bf16.msra.mxu0 %v510
    %647 = vmatpush.bf16.msra.mxu0 %v509
    %648 = vmatpush.bf16.msra.mxu0 %v508
    %649 = vmatpush.bf16.msra.mxu0 %v507
    %650 = vmatpush.bf16.msra.mxu0 %v506
    %651 = vmatpush.bf16.msra.mxu0 %v505
    %652 = vmatpush.bf16.msra.mxu0 %v504
    %653 = vmatpush.bf16.msra.mxu0 %v503
    %654 = vmatmul.bf16.gmra.mxu0 %v215
    %v655 = vpop.f32.mrf.mxu0
    %v656 = vadd.f32 %v643, %v655
    %v657 = vpop.f32.mrf.mxu0
    %658 = vdwg.mxu0
    %659 = vmatpush.bf16.msra.mxu0 %v518
    %660 = vmatpush.bf16.msra.mxu0 %v517
    %661 = vmatpush.bf16.msra.mxu0 %v516
    %662 = vmatpush.bf16.msra.mxu0 %v515
    %663 = vmatpush.bf16.msra.mxu0 %v514
    %664 = vmatpush.bf16.msra.mxu0 %v513
    %665 = vmatpush.bf16.msra.mxu0 %v512
    %666 = vmatpush.bf16.msra.mxu0 %v511
    %667 = vmatmul.bf16.gmra.mxu0 %v216
    %v668 = vpop.f32.mrf.mxu0
    %v669 = vadd.f32 %v656, %v668
    %v670 = vpop.f32.mrf.mxu0
    %671 = vdwg.mxu0
    %672 = vmatpush.bf16.msra.mxu0 %v526
    %673 = vmatpush.bf16.msra.mxu0 %v525
    %674 = vmatpush.bf16.msra.mxu0 %v524
    %675 = vmatpush.bf16.msra.mxu0 %v523
    %676 = vmatpush.bf16.msra.mxu0 %v522
    %677 = vmatpush.bf16.msra.mxu0 %v521
    %678 = vmatpush.bf16.msra.mxu0 %v520
    %679 = vmatpush.bf16.msra.mxu0 %v519
    %680 = vmatmul.bf16.gmra.mxu0 %v217
    %v681 = vpop.f32.mrf.mxu0
    %v682 = vadd.f32 %v669, %v681
    %v683 = vpop.f32.mrf.mxu0
    %684 = vdwg.mxu0
    %685 = vmatpush.bf16.msra.mxu0 %v534
    %686 = vmatpush.bf16.msra.mxu0 %v533
    %687 = vmatpush.bf16.msra.mxu0 %v532
    %688 = vmatpush.bf16.msra.mxu0 %v531
    %689 = vmatpush.bf16.msra.mxu0 %v530
    %690 = vmatpush.bf16.msra.mxu0 %v529
    %691 = vmatpush.bf16.msra.mxu0 %v528
    %692 = vmatpush.bf16.msra.mxu0 %v527
    %693 = vmatmul.bf16.gmra.mxu0 %v218
    %v694 = vpop.f32.mrf.mxu0
    %v695 = vadd.f32 %v682, %v694
    %v696 = vpop.f32.mrf.mxu0
    %697 = vdwg.mxu0
    %698 = vmatpush.bf16.msra.mxu0 %v542
    %699 = vmatpush.bf16.msra.mxu0 %v541
    %700 = vmatpush.bf16.msra.mxu0 %v540
    %701 = vmatpush.bf16.msra.mxu0 %v539
    %702 = vmatpush.bf16.msra.mxu0 %v538
    %703 = vmatpush.bf16.msra.mxu0 %v537
    %704 = vmatpush.bf16.msra.mxu0 %v536
    %705 = vmatpush.bf16.msra.mxu0 %v535
    %706 = vmatmul.bf16.gmra.mxu0 %v219
    %v707 = vpop.f32.mrf.mxu0
    %v708 = vadd.f32 %v695, %v707
    %v709 = vpop.f32.mrf.mxu0
    %710 = vdwg.mxu0
    %v711 = vmax.f32 %v708, 0.0
    %v712 = vpack.c.bf16 %v711, %v711
    %v714 = vperm.slane %v188, 0
    %v732 = vunpack.c.l.b16 %v172
    %v733 = vunpack.c.l.b16 %v173
    %v734 = vunpack.c.l.b16 %v174
    %v735 = vunpack.c.l.b16 %v175
    %v736 = vunpack.c.l.b16 %v176
    %v737 = vunpack.c.l.b16 %v177
    %v738 = vunpack.c.l.b16 %v178
    %v739 = vunpack.c.l.b16 %v179
    %v740 = vunpack.c.l.b16 %v180
    %v741 = vunpack.c.l.b16 %v181
    %v742 = vunpack.c.l.b16 %v182
    %v743 = vunpack.c.l.b16 %v183
    %v744 = vunpack.c.l.b16 %v184
    %v745 = vunpack.c.l.b16 %v185
    %v746 = vunpack.c.l.b16 %v186
    %v747 = vunpack.c.l.b16 %v187
    %v748 = vpack.c.b16 %v733, %v732
    %v749 = vpack.c.b16 %v735, %v734
    %v750 = vpack.c.b16 %v737, %v736
    %v751 = vpack.c.b16 %v739, %v738
    %v752 = vpack.c.b16 %v741, %v740
    %v753 = vpack.c.b16 %v743, %v742
    %v754 = vpack.c.b16 %v745, %v744
    %v755 = vpack.c.b16 %v747, %v746
    %764 = vmatpush.bf16.msra.mxu0 %v755
    %765 = vmatpush.bf16.msra.mxu0 %v754
    %766 = vmatpush.bf16.msra.mxu0 %v753
    %767 = vmatpush.bf16.msra.mxu0 %v752
    %768 = vmatpush.bf16.msra.mxu0 %v751
    %769 = vmatpush.bf16.msra.mxu0 %v750
    %770 = vmatpush.bf16.msra.mxu0 %v749
    %771 = vmatpush.bf16.msra.mxu0 %v748
    %772 = vmatmul.bf16.gmra.mxu0 %v712
    %v773 = vpop.f32.mrf.mxu0
    %v774 = vadd.f32 %v714, %v773
    %v775 = vpop.f32.mrf.mxu0
    %776 = vdwg.mxu0
    %vm777 = vcmask 254976
    %778 = vst.msk [vmem:[#allocation5] sm:$0x3] %vm777, %v774
    %v779 = vld [vmem:[%s1] sm:$0xff]
    %v780 = vld [vmem:[%s1 + $0x8] sm:$0xff]
    %783 = vst [vmem:[#allocation1] ss:$4 sm:$0xff] %v779
    %s784 = scalar_lea.vmem [#allocation1], 32
    %785 = vst [vmem:[%s784] ss:$4 sm:$0xff] %v780
    %v786 = vld.sshfl [vmem:[#allocation1] sm:$0xff pattern:$0x73625140]
    %v787 = vld.sshfl [vmem:[#allocation1 + $0x8] sm:$0xff pattern:$0x73625140]
    %v788 = vld.sshfl [vmem:[#allocation1 + $0x10] sm:$0xff pattern:$0x73625140]
    %v789 = vld.sshfl [vmem:[#allocation1 + $0x18] sm:$0xff pattern:$0x73625140]
    %v790 = vld.sshfl [vmem:[#allocation1 + $0x20] sm:$0xff pattern:$0x73625140]
    %v791 = vld.sshfl [vmem:[#allocation1 + $0x28] sm:$0xff pattern:$0x73625140]
    %v792 = vld.sshfl [vmem:[#allocation1 + $0x30] sm:$0xff pattern:$0x73625140]
    %v793 = vld.sshfl [vmem:[#allocation1 + $0x38] sm:$0xff pattern:$0x73625140]
    %v802 = vpack.c.bf16 %v786, %v786
    %v803 = vpack.c.bf16 %v787, %v787
    %v804 = vpack.c.bf16 %v788, %v788
    %v805 = vpack.c.bf16 %v789, %v789
    %v806 = vpack.c.bf16 %v790, %v790
    %v807 = vpack.c.bf16 %v791, %v791
    %v808 = vpack.c.bf16 %v792, %v792
    %v809 = vpack.c.bf16 %v793, %v793
    %810 = vmatpush.bf16.msra.mxu0 %v486
    %811 = vmatpush.bf16.msra.mxu0 %v485
    %812 = vmatpush.bf16.msra.mxu0 %v484
    %813 = vmatpush.bf16.msra.mxu0 %v483
    %814 = vmatpush.bf16.msra.mxu0 %v482
    %815 = vmatpush.bf16.msra.mxu0 %v481
    %816 = vmatpush.bf16.msra.mxu0 %v480
    %817 = vmatpush.bf16.msra.mxu0 %v479
    %818 = vmatmul.bf16.gmra.mxu0 %v802
    %v819 = vpop.f32.mrf.mxu0
    %v820 = vadd.f32 %v221, %v819
    %v821 = vpop.f32.mrf.mxu0
    %822 = vdwg.mxu0
    %823 = vmatpush.bf16.msra.mxu0 %v494
    %824 = vmatpush.bf16.msra.mxu0 %v493
    %825 = vmatpush.bf16.msra.mxu0 %v492
    %826 = vmatpush.bf16.msra.mxu0 %v491
    %827 = vmatpush.bf16.msra.mxu0 %v490
    %828 = vmatpush.bf16.msra.mxu0 %v489
    %829 = vmatpush.bf16.msra.mxu0 %v488
    %830 = vmatpush.bf16.msra.mxu0 %v487
    %831 = vmatmul.bf16.gmra.mxu0 %v803
    %v832 = vpop.f32.mrf.mxu0
    %v833 = vadd.f32 %v820, %v832
    %v834 = vpop.f32.mrf.mxu0
    %835 = vdwg.mxu0
    %836 = vmatpush.bf16.msra.mxu0 %v502
    %837 = vmatpush.bf16.msra.mxu0 %v501
    %838 = vmatpush.bf16.msra.mxu0 %v500
    %839 = vmatpush.bf16.msra.mxu0 %v499
    %840 = vmatpush.bf16.msra.mxu0 %v498
    %841 = vmatpush.bf16.msra.mxu0 %v497
    %842 = vmatpush.bf16.msra.mxu0 %v496
    %843 = vmatpush.bf16.msra.mxu0 %v495
    %844 = vmatmul.bf16.gmra.mxu0 %v804
    %v845 = vpop.f32.mrf.mxu0
    %v846 = vadd.f32 %v833, %v845
    %v847 = vpop.f32.mrf.mxu0
    %848 = vdwg.mxu0
    %849 = vmatpush.bf16.msra.mxu0 %v510
    %850 = vmatpush.bf16.msra.mxu0 %v509
    %851 = vmatpush.bf16.msra.mxu0 %v508
    %852 = vmatpush.bf16.msra.mxu0 %v507
    %853 = vmatpush.bf16.msra.mxu0 %v506
    %854 = vmatpush.bf16.msra.mxu0 %v505
    %855 = vmatpush.bf16.msra.mxu0 %v504
    %856 = vmatpush.bf16.msra.mxu0 %v503
    %857 = vmatmul.bf16.gmra.mxu0 %v805
    %v858 = vpop.f32.mrf.mxu0
    %v859 = vadd.f32 %v846, %v858
    %v860 = vpop.f32.mrf.mxu0
    %861 = vdwg.mxu0
    %862 = vmatpush.bf16.msra.mxu0 %v518
    %863 = vmatpush.bf16.msra.mxu0 %v517
    %864 = vmatpush.bf16.msra.mxu0 %v516
    %865 = vmatpush.bf16.msra.mxu0 %v515
    %866 = vmatpush.bf16.msra.mxu0 %v514
    %867 = vmatpush.bf16.msra.mxu0 %v513
    %868 = vmatpush.bf16.msra.mxu0 %v512
    %869 = vmatpush.bf16.msra.mxu0 %v511
    %870 = vmatmul.bf16.gmra.mxu0 %v806
    %v871 = vpop.f32.mrf.mxu0
    %v872 = vadd.f32 %v859, %v871
    %v873 = vpop.f32.mrf.mxu0
    %874 = vdwg.mxu0
    %875 = vmatpush.bf16.msra.mxu0 %v526
    %876 = vmatpush.bf16.msra.mxu0 %v525
    %877 = vmatpush.bf16.msra.mxu0 %v524
    %878 = vmatpush.bf16.msra.mxu0 %v523
    %879 = vmatpush.bf16.msra.mxu0 %v522
    %880 = vmatpush.bf16.msra.mxu0 %v521
    %881 = vmatpush.bf16.msra.mxu0 %v520
    %882 = vmatpush.bf16.msra.mxu0 %v519
    %883 = vmatmul.bf16.gmra.mxu0 %v807
    %v884 = vpop.f32.mrf.mxu0
    %v885 = vadd.f32 %v872, %v884
    %v886 = vpop.f32.mrf.mxu0
    %887 = vdwg.mxu0
    %888 = vmatpush.bf16.msra.mxu0 %v534
    %889 = vmatpush.bf16.msra.mxu0 %v533
    %890 = vmatpush.bf16.msra.mxu0 %v532
    %891 = vmatpush.bf16.msra.mxu0 %v531
    %892 = vmatpush.bf16.msra.mxu0 %v530
    %893 = vmatpush.bf16.msra.mxu0 %v529
    %894 = vmatpush.bf16.msra.mxu0 %v528
    %895 = vmatpush.bf16.msra.mxu0 %v527
    %896 = vmatmul.bf16.gmra.mxu0 %v808
    %v897 = vpop.f32.mrf.mxu0
    %v898 = vadd.f32 %v885, %v897
    %v899 = vpop.f32.mrf.mxu0
    %900 = vdwg.mxu0
    %901 = vmatpush.bf16.msra.mxu0 %v542
    %902 = vmatpush.bf16.msra.mxu0 %v541
    %903 = vmatpush.bf16.msra.mxu0 %v540
    %904 = vmatpush.bf16.msra.mxu0 %v539
    %905 = vmatpush.bf16.msra.mxu0 %v538
    %906 = vmatpush.bf16.msra.mxu0 %v537
    %907 = vmatpush.bf16.msra.mxu0 %v536
    %908 = vmatpush.bf16.msra.mxu0 %v535
    %909 = vmatmul.bf16.gmra.mxu0 %v809
    %v910 = vpop.f32.mrf.mxu0
    %v911 = vadd.f32 %v898, %v910
    %v912 = vpop.f32.mrf.mxu0
    %913 = vdwg.mxu0
    %v914 = vmax.f32 %v911, 0.0
    %v915 = vpack.c.bf16 %v914, %v914
    %916 = vmatpush.bf16.msra.mxu0 %v755
    %917 = vmatpush.bf16.msra.mxu0 %v754
    %918 = vmatpush.bf16.msra.mxu0 %v753
    %919 = vmatpush.bf16.msra.mxu0 %v752
    %920 = vmatpush.bf16.msra.mxu0 %v751
    %921 = vmatpush.bf16.msra.mxu0 %v750
    %922 = vmatpush.bf16.msra.mxu0 %v749
    %923 = vmatpush.bf16.msra.mxu0 %v748
    %924 = vmatmul.bf16.gmra.mxu0 %v915
    %v925 = vpop.f32.mrf.mxu0
    %v926 = vadd.f32 %v714, %v925
    %v927 = vpop.f32.mrf.mxu0
    %928 = vdwg.mxu0
    %929 = vst.msk [vmem:[#allocation6] sm:$0x3] %vm777, %v926
    // Predicated region
    $region30: #{siamese_forward.1} parent=1 // pred_check
      _
    $region31: #{siamese_forward.1} parent=1 // pred_check_branch
      %931 = sbr.rel (0) target = $region33
    $region32: #{siamese_forward.1} parent=1 // pred_region
      %933 = vsyncadd [#allocation4], 0
      %s935 = sshll.u32 [#allocation5], 4
      %s936 = int_to_ptr.vmem [resolvable:$true] %s935
      %s937 = sshll.u32 %s6, 4
      %s938 = int_to_ptr.hbm [resolvable:$true] %s937
      %940 = dma.vmem_to_hbm [thread:$0]  %s936, 32, %s938, [#allocation4]
    $region33: #{siamese_forward.1} parent=1 // pred_fallthru
      _
    // Predicated region
    $region34: #{siamese_forward.1} parent=1 // pred_check
      _
    $region35: #{siamese_forward.1} parent=1 // pred_check_branch
      %942 = sbr.rel (0) target = $region37
    $region36: #{siamese_forward.1} parent=1 // pred_region
      %944 = vsyncadd [#allocation7], 0
      %s946 = sshll.u32 [#allocation6], 4
      %s947 = int_to_ptr.vmem [resolvable:$true] %s946
      %s948 = sshll.u32 %s7, 4
      %s949 = int_to_ptr.hbm [resolvable:$true] %s948
      %951 = dma.vmem_to_hbm [thread:$0]  %s947, 32, %s949, [#allocation7]
    $region37: #{siamese_forward.1} parent=1 // pred_fallthru
      _
    // Predicated region
    $region38: #{siamese_forward.1} parent=1 // pred_check
      _
    $region39: #{siamese_forward.1} parent=1 // pred_check_branch
      %953 = sbr.rel (0) target = $region41
    $region40: #{siamese_forward.1} parent=1 // pred_region
      %955 = dma.done [#allocation4], 32
    $region41: #{siamese_forward.1} parent=1 // pred_fallthru
      _
    // Predicated region
    $region42: #{siamese_forward.1} parent=1 // pred_check
      _
    $region43: #{siamese_forward.1} parent=1 // pred_check_branch
      %957 = sbr.rel (0) target = $region45
    $region44: #{siamese_forward.1} parent=1 // pred_region
      %959 = dma.done [#allocation7], 32
    $region45: #{siamese_forward.1} parent=1 // pred_fallthru
      _
    %960 = vsyncpa [#allocation3], 1
    %961 = vsyncpa [#allocation4], 1
    %962 = vsyncpa [#allocation7], 1

</llo_original>
